<compile_context>
chip_gen: v7x
topology: tpu7x:2x2x1
jax: 0.10.0
libtpu: 0.0.40
codegen_flags: <defaults>
</compile_context>

<pallas_src>
import functools
import math

import jax
import jax.numpy as jnp
from jax import lax
from jax.experimental import pallas as pl
from jax.experimental.pallas import tpu as pltpu

NUM_GROUPS = 32
EPS = 1e-5
# 48 MiB scoped VMEM: leaves headroom on v7x (64 MiB physical); far under v5e/v6e's 128 MiB.
VMEM_LIMIT = 48 * 1024 * 1024


def _pick_tile(total, target):
    """Largest divisor of `total` that is <= target and sublane-aligned (or full)."""
    if total <= target:
        return total
    for t in range(min(target, total), 0, -1):
        if total % t == 0 and t % 8 == 0:
            return t
    return total


# ----------------------------------------------------------------------------
# Kernel 1: per-(batch, hw-tile) partial GroupNorm sums (fully parallel grid)
# ----------------------------------------------------------------------------
def gn_partial_kernel(x_ref, sum_ref, sumsq_ref):
    x = x_ref[0]                                               # (thw, C) f32
    sum_ref[...] = jnp.sum(x, axis=0, keepdims=True).reshape(sum_ref.shape)
    sumsq_ref[...] = jnp.sum(x * x, axis=0, keepdims=True).reshape(sumsq_ref.shape)


# ----------------------------------------------------------------------------
# Kernel 2: normalize + Q/K/V projection (bf16 MXU inputs, f32 accumulation)
# ----------------------------------------------------------------------------
def qkv_proj_kernel(x_ref, scale_ref, shift_ref, wq_ref, wk_ref, wv_ref,
                    bq_ref, bk_ref, bv_ref, q_ref, k_ref, v_ref):
    x = x_ref[0]                                               # (thw, C) f32
    xn = (x * scale_ref[0] + shift_ref[0]).astype(jnp.bfloat16)
    q = jnp.dot(xn, wq_ref[...], preferred_element_type=jnp.float32) + bq_ref[...]
    k = jnp.dot(xn, wk_ref[...], preferred_element_type=jnp.float32) + bk_ref[...]
    v = jnp.dot(xn, wv_ref[...], preferred_element_type=jnp.float32) + bv_ref[...]
    q_ref[0] = q.astype(jnp.bfloat16)        # q already carries the 1/sqrt(C) scale
    k_ref[0] = k.astype(jnp.bfloat16)
    v_ref[0] = v.astype(jnp.bfloat16)


# ----------------------------------------------------------------------------
# Kernel 3: flash attention (K/V VMEM-resident per batch) + out_proj + residual
# grid = (N, num_q_tiles, num_kv_tiles); kv axis is the (last, arbitrary) reduction.
# ----------------------------------------------------------------------------
def flash_attn_kernel(q_ref, k_ref, v_ref, x_res_ref, w_out_ref, b_out_ref,
                      o_ref, m_sc, l_sc, acc_sc, *, kv_tile):
    ki = pl.program_id(2)

    @pl.when(ki == 0)
    def _():
        m_sc[...] = jnp.full(m_sc.shape, -jnp.inf, m_sc.dtype)
        l_sc[...] = jnp.zeros(l_sc.shape, l_sc.dtype)
        acc_sc[...] = jnp.zeros(acc_sc.shape, acc_sc.dtype)

    q = q_ref[0]                                   # (tq, C) bf16 (pre-scaled by 1/sqrt(C))
    # K/V blocks cover the full sequence per batch (resident in VMEM); slice this
    # kv step's tile out of them.
    kv0 = pl.multiple_of(ki * kv_tile, kv_tile)
    k = k_ref[0, pl.ds(kv0, kv_tile), :]           # (tk, C) bf16
    v = v_ref[0, pl.ds(kv0, kv_tile), :]           # (tk, C) bf16

    s = lax.dot_general(q, k, (((1,), (1,)), ((), ())),
                        preferred_element_type=jnp.float32)     # (tq, tk) f32

    m_prev = m_sc[...]                                          # (tq, 1)
    m_new = jnp.maximum(m_prev, jnp.max(s, axis=-1, keepdims=True))
    alpha = jnp.exp(m_prev - m_new)
    p = jnp.exp(s - m_new)                                      # unnormalized probs
    l_sc[...] = alpha * l_sc[...] + jnp.sum(p, axis=-1, keepdims=True)
    acc_sc[...] = alpha * acc_sc[...] + jnp.dot(
        p.astype(jnp.bfloat16), v, preferred_element_type=jnp.float32)
    m_sc[...] = m_new

    @pl.when(ki == pl.num_programs(2) - 1)
    def _():
        # deferred softmax normalization (EUP reciprocal, not HW*HW divides)
        attn = acc_sc[...] * pl.reciprocal(l_sc[...], approx=True)
        out = jnp.dot(attn.astype(jnp.bfloat16), w_out_ref[...],
                      preferred_element_type=jnp.float32) + b_out_ref[...]
        # residual: re-read the pre-norm input from VMEM
        o_ref[0] = out + x_res_ref[0]


# ----------------------------------------------------------------------------
# Wrapper
# ----------------------------------------------------------------------------
def vae_attention_block(x_nchw, params, *, hw_tile=1024, q_tile=512, kv_tile=512):
    """x_nchw: (N, C, H, W) float32 -> (N, C, H, W) float32."""
    n, c, h, w = x_nchw.shape
    assert c % NUM_GROUPS == 0
    hw = h * w
    cpg = c // NUM_GROUPS

    # NCHW -> (N, HW, C)   (mirrors x.view(n,c,hw).transpose(-1,-2))
    x_seq = jnp.transpose(x_nchw.reshape(n, c, hw), (0, 2, 1)).astype(jnp.float32)

    # ---- parameter prep (wrapper-side, one-time) ----
    gamma = params["gamma"].reshape(1, c).astype(jnp.float32)
    beta = params["beta"].reshape(1, c).astype(jnp.float32)

    inv_sqrt_c = 1.0 / math.sqrt(c)
    w_in = params["w_in"]                       # (3C, C)
    b_in = params["b_in"]                       # (3C,)
    # fold the 1/sqrt(C) attention scale into the Q projection
    w_q_t = (w_in[:c] * inv_sqrt_c).T.astype(jnp.bfloat16)          # (C, C)
    w_k_t = w_in[c:2 * c].T.astype(jnp.bfloat16)                    # (C, C)
    w_v_t = w_in[2 * c:].T.astype(jnp.bfloat16)                     # (C, C)
    b_q = (b_in[:c] * inv_sqrt_c).reshape(1, c).astype(jnp.float32)
    b_k = b_in[c:2 * c].reshape(1, c).astype(jnp.float32)
    b_v = b_in[2 * c:].reshape(1, c).astype(jnp.float32)
    w_out_t = params["w_out"].T.astype(jnp.bfloat16)                # (C, C)
    b_out = params["b_out"].reshape(1, c).astype(jnp.float32)

    thw = _pick_tile(hw, hw_tile)
    tq = _pick_tile(hw, q_tile)
    tk = _pick_tile(hw, kv_tile)
    assert hw % thw == 0 and hw % tq == 0 and hw % tk == 0, "HW must tile evenly"
    n_tiles = hw // thw

    # ---- pass 1: per-(batch, hw-tile) partial sums (both grid axes parallel) ----
    psum, psumsq = pl.pallas_call(
        gn_partial_kernel,
        out_shape=(jax.ShapeDtypeStruct((n, n_tiles, 1, c), jnp.float32),
                   jax.ShapeDtypeStruct((n, n_tiles, 1, c), jnp.float32)),
        grid=(n, n_tiles),
        in_specs=[pl.BlockSpec((1, thw, c), lambda b, t: (b, t, 0))],
        out_specs=(pl.BlockSpec((1, 1, 1, c), lambda b, t: (b, t, 0, 0)),
                   pl.BlockSpec((1, 1, 1, c), lambda b, t: (b, t, 0, 0))),
        compiler_params=pltpu.CompilerParams(
            dimension_semantics=("parallel", "parallel"),
            vmem_limit_bytes=VMEM_LIMIT),
    )(x_seq)

    # ---- tiny epilogue (O(N*C) scalars in plain JAX): group pooling -> scale/shift ----
    sums = psum.reshape(n, n_tiles, c).sum(axis=1)               # (N, C)
    sumsqs = psumsq.reshape(n, n_tiles, c).sum(axis=1)           # (N, C)
    count = jnp.float32(hw * cpg)
    g_mean = sums.reshape(n, NUM_GROUPS, cpg).sum(axis=2) / count   # (N, G)
    g_msq = sumsqs.reshape(n, NUM_GROUPS, cpg).sum(axis=2) / count  # (N, G)
    g_var = jnp.maximum(g_msq - g_mean * g_mean, 0.0)            # cancellation guard
    g_rstd = lax.rsqrt(g_var + EPS)
    mean_c = jnp.repeat(g_mean, cpg, axis=1)                     # (N, C)
    rstd_c = jnp.repeat(g_rstd, cpg, axis=1)                     # (N, C)
    scale = (gamma * rstd_c).reshape(n, 1, c)
    shift = (beta - mean_c * gamma * rstd_c).reshape(n, 1, c)

    # ---- pass 2: normalize + Q/K/V projections (bf16) ----
    q_all, k_all, v_all = pl.pallas_call(
        qkv_proj_kernel,
        out_shape=(jax.ShapeDtypeStruct((n, hw, c), jnp.bfloat16),
                   jax.ShapeDtypeStruct((n, hw, c), jnp.bfloat16),
                   jax.ShapeDtypeStruct((n, hw, c), jnp.bfloat16)),
        grid=(n, n_tiles),
        in_specs=[
            pl.BlockSpec((1, thw, c), lambda b, t: (b, t, 0)),
            pl.BlockSpec((1, 1, c), lambda b, t: (b, 0, 0)),
            pl.BlockSpec((1, 1, c), lambda b, t: (b, 0, 0)),
            pl.BlockSpec((c, c), lambda b, t: (0, 0)),
            pl.BlockSpec((c, c), lambda b, t: (0, 0)),
            pl.BlockSpec((c, c), lambda b, t: (0, 0)),
            pl.BlockSpec((1, c), lambda b, t: (0, 0)),
            pl.BlockSpec((1, c), lambda b, t: (0, 0)),
            pl.BlockSpec((1, c), lambda b, t: (0, 0)),
        ],
        out_specs=(
            pl.BlockSpec((1, thw, c), lambda b, t: (b, t, 0)),
            pl.BlockSpec((1, thw, c), lambda b, t: (b, t, 0)),
            pl.BlockSpec((1, thw, c), lambda b, t: (b, t, 0)),
        ),
        compiler_params=pltpu.CompilerParams(
            dimension_semantics=("parallel", "parallel"),
            vmem_limit_bytes=VMEM_LIMIT),
    )(x_seq, scale, shift, w_q_t, w_k_t, w_v_t, b_q, b_k, b_v)

    # ---- pass 3: flash attention (resident K/V) + out_proj + residual ----
    out_seq = pl.pallas_call(
        functools.partial(flash_attn_kernel, kv_tile=tk),
        out_shape=jax.ShapeDtypeStruct((n, hw, c), jnp.float32),
        grid=(n, hw // tq, hw // tk),
        in_specs=[
            pl.BlockSpec((1, tq, c), lambda b, qi, ki: (b, qi, 0)),
            # K / V: full (1, HW, C) blocks, index_map constant in (qi, ki)
            # -> DMA'd once per batch and kept resident in VMEM.
            pl.BlockSpec((1, hw, c), lambda b, qi, ki: (b, 0, 0)),
            pl.BlockSpec((1, hw, c), lambda b, qi, ki: (b, 0, 0)),
            pl.BlockSpec((1, tq, c), lambda b, qi, ki: (b, qi, 0)),
            pl.BlockSpec((c, c), lambda b, qi, ki: (0, 0)),
            pl.BlockSpec((1, c), lambda b, qi, ki: (0, 0)),
        ],
        out_specs=pl.BlockSpec((1, tq, c), lambda b, qi, ki: (b, qi, 0)),
        scratch_shapes=[pltpu.VMEM((tq, 1), jnp.float32),
                        pltpu.VMEM((tq, 1), jnp.float32),
                        pltpu.VMEM((tq, c), jnp.float32)],
        compiler_params=pltpu.CompilerParams(
            dimension_semantics=("parallel", "parallel", "arbitrary"),
            vmem_limit_bytes=VMEM_LIMIT),
    )(q_all, k_all, v_all, x_seq, w_out_t, b_out)

    # (N, HW, C) -> NCHW
    return jnp.transpose(out_seq, (0, 2, 1)).reshape(n, c, h, w)


# ----------------------------------------------------------------------------
# Pure-JAX reference (mirror of the PyTorch forward) and test harness
# ----------------------------------------------------------------------------
def reference(x_nchw, params):
    n, c, h, w = x_nchw.shape
    xg = x_nchw.reshape(n, NUM_GROUPS, c // NUM_GROUPS, h, w)
    mean = xg.mean(axis=(2, 3, 4), keepdims=True)
    var = xg.var(axis=(2, 3, 4), keepdims=True)           # biased, like PyTorch GN
    xn = (xg - mean) / jnp.sqrt(var + EPS)
    xn = xn.reshape(n, c, h, w)
    xn = xn * params["gamma"][None, :, None, None] + params["beta"][None, :, None, None]

    seq = jnp.transpose(xn.reshape(n, c, h * w), (0, 2, 1))          # (N, HW, C)
    qkv = seq @ params["w_in"].T + params["b_in"]
    q, k, v = jnp.split(qkv, 3, axis=-1)
    wts = (q @ jnp.swapaxes(k, -1, -2)) / math.sqrt(c)
    wts = jax.nn.softmax(wts, axis=-1)
    out = wts @ v
    out = out @ params["w_out"].T + params["b_out"]
    out = jnp.transpose(out, (0, 2, 1)).reshape(n, c, h, w)
    return out + x_nchw


def make_params(key, channels):
    ks = jax.random.split(key, 6)
    s = 0.05
    return {
        "gamma": 1.0 + 0.1 * jax.random.normal(ks[0], (channels,), jnp.float32),
        "beta": 0.1 * jax.random.normal(ks[1], (channels,), jnp.float32),
        "w_in": s * jax.random.normal(ks[2], (3 * channels, channels), jnp.float32),
        "b_in": s * jax.random.normal(ks[3], (3 * channels,), jnp.float32),
        "w_out": s * jax.random.normal(ks[4], (channels, channels), jnp.float32),
        "b_out": s * jax.random.normal(ks[5], (channels,), jnp.float32),
    }


if __name__ == "__main__":
    key = jax.random.PRNGKey(0)
    k_x, k_p = jax.random.split(key)

    # GroupNorm(32, C) requires C % 32 == 0; C=128 keeps outputs lane-dense (128 lanes).
    N, C, H, W = 2, 128, 16, 16
    x = jax.random.normal(k_x, (N, C, H, W), jnp.float32)
    params = make_params(k_p, C)

    out = vae_attention_block(x, params)
    out = jax.block_until_ready(out)

    ref = reference(x, params)
    assert out.shape == (N, C, H, W)
    max_err = jnp.max(jnp.abs(out - ref))
    # bf16 MXU inputs (f32 accumulation) -> slightly looser tolerance than pure f32
    assert jnp.allclose(out, ref, atol=2e-2, rtol=2e-2), f"max abs err = {max_err}"

    print("KERNEL_OK")
</pallas_src>

<mosaic_0001>
module attributes {stable_mosaic.version = 11 : i64} {
  func.func @gn_partial_kernel(%arg0: i32, %arg1: i32, %arg2: memref<1x256x128xf32, #tpu.memory_space<vmem>>, %arg3: memref<1x1x1x128xf32, #tpu.memory_space<vmem>>, %arg4: memref<1x1x1x128xf32, #tpu.memory_space<vmem>>) attributes {dimension_semantics = [#tpu.dimension_semantics<parallel>, #tpu.dimension_semantics<parallel>], iteration_bounds = array<i64: 2, 1>, scalar_prefetch = 0 : i64, scratch_operands = 0 : i64, tpu.core_type = #tpu.core_type<tc>, window_params = [{transform_indices = @transform_0, window_bounds = array<i64: 1, 256, 128>}, {transform_indices = @transform_1, window_bounds = array<i64: 1, 1, 1, 128>}, {transform_indices = @transform_2, window_bounds = array<i64: 1, 1, 1, 128>}]} {
    %c0 = arith.constant 0 : index
    %c0_0 = arith.constant 0 : index
    %c0_1 = arith.constant 0 : index
    %0 = vector.load %arg2[%c0, %c0_0, %c0_1] : memref<1x256x128xf32, #tpu.memory_space<vmem>>, vector<1x256x128xf32>
    %1 = vector.shape_cast %0 : vector<1x256x128xf32> to vector<256x128xf32>
    %cst = arith.constant dense<0.000000e+00> : vector<128xf32>
    %2 = vector.multi_reduction <add>, %1, %cst [0] : vector<256x128xf32> to vector<128xf32>
    %3 = vector.shape_cast %2 : vector<128xf32> to vector<1x128xf32>
    %4 = vector.shape_cast %3 : vector<1x128xf32> to vector<1x1x1x128xf32>
    %c0_2 = arith.constant 0 : index
    %c0_3 = arith.constant 0 : index
    %c0_4 = arith.constant 0 : index
    %c0_5 = arith.constant 0 : index
    %5 = vector.load %arg3[%c0_2, %c0_3, %c0_4, %c0_5] : memref<1x1x1x128xf32, #tpu.memory_space<vmem>>, vector<1x1x1x128xf32>
    tpu.vector_store %arg3[%c0_2, %c0_3, %c0_4, %c0_5], %4 {strides = array<i32>} : memref<1x1x1x128xf32, #tpu.memory_space<vmem>>, vector<1x1x1x128xf32>,
    %6 = arith.mulf %1, %1 : vector<256x128xf32>
    %cst_6 = arith.constant dense<0.000000e+00> : vector<128xf32>
    %7 = vector.multi_reduction <add>, %6, %cst_6 [0] : vector<256x128xf32> to vector<128xf32>
    %8 = vector.shape_cast %7 : vector<128xf32> to vector<1x128xf32>
    %9 = vector.shape_cast %8 : vector<1x128xf32> to vector<1x1x1x128xf32>
    %c0_7 = arith.constant 0 : index
    %c0_8 = arith.constant 0 : index
    %c0_9 = arith.constant 0 : index
    %c0_10 = arith.constant 0 : index
    %10 = vector.load %arg4[%c0_7, %c0_8, %c0_9, %c0_10] : memref<1x1x1x128xf32, #tpu.memory_space<vmem>>, vector<1x1x1x128xf32>
    tpu.vector_store %arg4[%c0_7, %c0_8, %c0_9, %c0_10], %9 {strides = array<i32>} : memref<1x1x1x128xf32, #tpu.memory_space<vmem>>, vector<1x1x1x128xf32>,
    return
  }
  func.func @transform_0(%arg0: i32, %arg1: i32) -> (i32, i32, i32) {
    %c0_i32 = arith.constant 0 : i32
    %c0_i32_0 = arith.constant 0 : i32
    return %arg0, %arg1, %c0_i32 : i32, i32, i32
  }
  func.func @transform_1(%arg0: i32, %arg1: i32) -> (i32, i32, i32, i32) {
    %c0_i32 = arith.constant 0 : i32
    %c0_i32_0 = arith.constant 0 : i32
    %c0_i32_1 = arith.constant 0 : i32
    return %arg0, %arg1, %c0_i32, %c0_i32_0 : i32, i32, i32, i32
  }
  func.func @transform_2(%arg0: i32, %arg1: i32) -> (i32, i32, i32, i32) {
    %c0_i32 = arith.constant 0 : i32
    %c0_i32_0 = arith.constant 0 : i32
    %c0_i32_1 = arith.constant 0 : i32
    return %arg0, %arg1, %c0_i32, %c0_i32_0 : i32, i32, i32, i32
  }
}

</mosaic_0001>

<llo_original>
// kernel: tpu_custom_call.1
$region0: #{tpu_custom_call.1}
  #allocation0 [shape = 'u32[]', space=smem, size = 0x4, offset = 0x4, fixed_abs, tag = 'smem constant byte address 0x4 - core index']
  #allocation1 [shape = 'u32[144,128]{1,0:T(1,128)}', space=vmem, size = 0x12000, scoped, tag = 'internal scratch']
  %s0 = inlined_call_operand.hbm [shape: f32[2,256,128], index: 0, kind: input, shape index: {}]
  %s1 = inlined_call_operand.hbm [shape: f32[2,1,1,128], index: 1, kind: output, shape index: {0}]
  %s2 = inlined_call_operand.hbm [shape: f32[2,1,1,128], index: 2, kind: output, shape index: {1}]
  %3 = xla_tuple %s1, %s2
  %s4 = sld [smem:[#allocation0]]
  $region49: #{tpu_custom_call.1} parent=0
    _
  %s6 = ssub.s32 1, %s4
  %s7 = scalar_select 0, %s6, %s4
  $region1: #{tpu_custom_call.1} parent=0
    #allocation2 [shape = 'u8[262144]{0}', space=vmem, size = 0x40000, scoped, tag = 'input window, operand 0']
    #allocation3 [shape = 's32[2]{0}', space=sflag, size = 0x8, scoped, tag = 'scoped memory for tpu_custom_call.1']
    #allocation4 [shape = 's32[2]{0}', space=sflag, size = 0x8, scoped, tag = 'scoped memory for tpu_custom_call.1']
    #allocation5 [shape = 'u8[1024]{0}', space=vmem, size = 0x400, scoped, tag = 'output window, operand 0']
    #allocation6 [shape = 'u8[1024]{0}', space=vmem, size = 0x400, scoped, tag = 'output window, operand 1']
    #allocation7 [shape = 's32[2]{0}', space=sflag, size = 0x8, scoped, tag = 'scoped memory for tpu_custom_call.1']
    %8 = vsyncpa [#allocation3], 0
    %s9 = scalar_lea.sflag [#allocation3], 1
    %10 = vsyncpa %s9, 0
    %11 = vsyncpa [#allocation4], 0
    %s12 = scalar_lea.sflag [#allocation4], 1
    %13 = vsyncpa %s12, 0
    %14 = vsyncpa [#allocation7], 0
    %s15 = scalar_lea.sflag [#allocation7], 1
    %16 = vsyncpa %s15, 0
    loop: start=0, step=1, limit=4
    $region2: #{tpu_custom_call.1} parent=1 // loop_pre_header
      _
    $region3: #{tpu_custom_call.1} parent=1 // loop_header
      %s18 = sphi 0, %s22
      %p19 = scmp.ge.s32.totalorder %s18, 4
      %s25 = sphi 0, %s37
      %s26 = sphi 0, %s33
      %s27 = sphi 0, %s25
      %s28 = sphi 0, %s26
      %s29 = sphi 0, %s27
      %s30 = sphi 0, %s28
      %s42 = sphi 0, %s44
      %s45 = sphi 0, %s42
      %s46 = sphi 0, %s45
      %s62 = sphi 0, %s46
      %s70 = sphi 0, %s72
      %s73 = sphi 0, %s70
      %s74 = sphi 0, %s73
      %s90 = sphi 0, %s74
      %s98 = sphi 0, %s100
      %s101 = sphi 0, %s98
      %s102 = sphi 0, %s101
      %s118 = sphi 0, %s102
    $region4: #{tpu_custom_call.1} parent=1 // loop_header_branch
      %21 = sbr.rel (%p19) target = $region8
    $region5: #{tpu_custom_call.1} parent=1 // loop_body
      %s23 = ssub.s32 %s18, 1
      %s24 = ssub.s32 %s18, 2
      %s31 = sadd.s32 1, %s26
      %p32 = scmp.ge.s32.totalorder %s31, 1
      %s33 = scalar_select %p32, 0, %s31
      %s34 = sadd.s32 1, %s25
      %s35 = scalar_select %p32, %s34, %s25
      %p36 = scmp.ge.s32.totalorder %s35, 2
      %s37 = scalar_select %p36, 0, %s35
      %s38 = ssub.s32 %s25, %s37
      %s39 = ssub.s32 %s26, %s33
      %s40 = sor.u32 %s38, %s39
      %p41 = scmp.eq.s32.totalorder %s40, 0
      %s43 = sadd.s32 %s42, 1
      %s44 = scalar_select %p41, %s42, %s43
      %p47 = pneg %p41
      %p48 = scmp.eq.s32.totalorder %s18, 1
      %p49 = por %p47, %p48
      %p50 = scmp.ne.s32.totalorder %s42, %s45
      %p51 = scmp.eq.s32.totalorder %s18, 0
      %p52 = por %p50, %p51
      %p53 = scmp.ne.s32.totalorder %s42, %s45
      %p54 = scmp.eq.s32.totalorder %s23, 1
      %p55 = por %p53, %p54
      %p56 = scmp.ne.s32.totalorder %s45, %s46
      %p57 = scmp.eq.s32.totalorder %s23, 0
      %p58 = por %p56, %p57
      %p59 = scmp.ne.s32.totalorder %s45, %s46
      %p60 = scmp.eq.s32.totalorder %s24, 1
      %p61 = por %p59, %p60
      %p63 = scmp.ne.s32.totalorder %s46, %s62
      %p64 = scmp.eq.s32.totalorder %s24, 0
      %p65 = por %p63, %p64
      %s66 = ssub.s32 %s25, %s37
      %s67 = ssub.s32 %s26, %s33
      %s68 = sor.u32 %s66, %s67
      %p69 = scmp.eq.s32.totalorder %s68, 0
      %s71 = sadd.s32 %s70, 1
      %s72 = scalar_select %p69, %s70, %s71
      %p75 = pneg %p69
      %p76 = scmp.eq.s32.totalorder %s18, 1
      %p77 = por %p75, %p76
      %p78 = scmp.ne.s32.totalorder %s70, %s73
      %p79 = scmp.eq.s32.totalorder %s18, 0
      %p80 = por %p78, %p79
      %p81 = scmp.ne.s32.totalorder %s70, %s73
      %p82 = scmp.eq.s32.totalorder %s23, 1
      %p83 = por %p81, %p82
      %p84 = scmp.ne.s32.totalorder %s73, %s74
      %p85 = scmp.eq.s32.totalorder %s23, 0
      %p86 = por %p84, %p85
      %p87 = scmp.ne.s32.totalorder %s73, %s74
      %p88 = scmp.eq.s32.totalorder %s24, 1
      %p89 = por %p87, %p88
      %p91 = scmp.ne.s32.totalorder %s74, %s90
      %p92 = scmp.eq.s32.totalorder %s24, 0
      %p93 = por %p91, %p92
      %s94 = ssub.s32 %s25, %s37
      %s95 = ssub.s32 %s26, %s33
      %s96 = sor.u32 %s94, %s95
      %p97 = scmp.eq.s32.totalorder %s96, 0
      %s99 = sadd.s32 %s98, 1
      %s100 = scalar_select %p97, %s98, %s99
      %p103 = pneg %p97
      %p104 = scmp.eq.s32.totalorder %s18, 1
      %p105 = por %p103, %p104
      %p106 = scmp.ne.s32.totalorder %s98, %s101
      %p107 = scmp.eq.s32.totalorder %s18, 0
      %p108 = por %p106, %p107
      %p109 = scmp.ne.s32.totalorder %s98, %s101
      %p110 = scmp.eq.s32.totalorder %s23, 1
      %p111 = por %p109, %p110
      %p112 = scmp.ne.s32.totalorder %s101, %s102
      %p113 = scmp.eq.s32.totalorder %s23, 0
      %p114 = por %p112, %p113
      %p115 = scmp.ne.s32.totalorder %s101, %s102
      %p116 = scmp.eq.s32.totalorder %s24, 1
      %p117 = por %p115, %p116
      %p119 = scmp.ne.s32.totalorder %s102, %s118
      %p120 = scmp.eq.s32.totalorder %s24, 0
      %p121 = por %p119, %p120
      %p122 = scmp.le.s32.totalorder 1, %s18
      %p123 = scmp.lt.s32.totalorder %s18, 3
      %p124 = pnand %p122, %p123
      %p125 = pneg %p124
      // Predicated region
      $region9: #{tpu_custom_call.1} parent=5 // pred_check
        _
      $region10: #{tpu_custom_call.1} parent=5 // pred_check_branch
        %127 = sbr.rel (%p124) target = $region12
      $region11: #{tpu_custom_call.1} parent=5 // pred_region
        %s128 = ssub.s32 %s18, 1
      $region12: #{tpu_custom_call.1} parent=5 // pred_fallthru
        _
      %p129 = scmp.lt.s32.totalorder %s18, 2
      // Predicated region
      $region13: #{tpu_custom_call.1} parent=5 // pred_check
        %p130 = pneg %p129
      $region14: #{tpu_custom_call.1} parent=5 // pred_check_branch
        %132 = sbr.rel (%p130) target = $region16
      $region15: #{tpu_custom_call.1} parent=5 // pred_region
        // Predicated region
        $region17: #{tpu_custom_call.1} parent=15 // pred_check
          %p133 = pneg %p52
        $region18: #{tpu_custom_call.1} parent=15 // pred_check_branch
          %135 = sbr.rel (%p133) target = $region20
        $region19: #{tpu_custom_call.1} parent=15 // pred_region
          %s136 = sand.u32 %s42, 1
          %s137 = scalar_lea.sflag [#allocation3], %s136
          %s138 = sand.u32 %s42, 1
          %s139 = smul.addr %s138, 256
          %s140 = scalar_lea.vmem [#allocation2], %s139
          %s141 = smul.u32 32, %s26
          %s143 = ssub.s32 4096, 4096
          %144 = vsyncadd %s137, %s143
          %s145 = smul.addr %s25, 32
          %s146 = sadd.s32 %s141, %s145
          %s147 = smul.addr %s146, 128
          %s148 = scalar_lea.hbm %s0, %s147
          %s149 = sshll.u32 %s140, 4
          %s150 = int_to_ptr.vmem [resolvable:$true] %s149
          %155 = dma.hbm_to_vmem [thread:$0]  %s148, 4096, %s150, %s137, 128, 128, 8
        $region20: #{tpu_custom_call.1} parent=15 // pred_fallthru
          _
      $region16: #{tpu_custom_call.1} parent=5 // pred_fallthru
        _
      %p156 = scmp.le.s32.totalorder 1, %s18
      %p157 = scmp.lt.s32.totalorder %s18, 3
      %p158 = pnand %p156, %p157
      %p159 = pneg %p158
      // Predicated region
      $region21: #{tpu_custom_call.1} parent=5 // pred_check
        _
      $region22: #{tpu_custom_call.1} parent=5 // pred_check_branch
        %161 = sbr.rel (%p158) target = $region24
      $region23: #{tpu_custom_call.1} parent=5 // pred_region
        %s162 = ssub.s32 %s18, 1
        %s163 = sand.u32 %s45, 1
        %s164 = scalar_lea.sflag [#allocation3], %s163
        %s165 = sand.u32 %s45, 1
        %s166 = smul.addr %s165, 256
        %s167 = scalar_lea.vmem [#allocation2], %s166
        // Predicated region
        $region25: #{tpu_custom_call.1} parent=23 // pred_check
          %p168 = pneg %p58
        $region26: #{tpu_custom_call.1} parent=23 // pred_check_branch
          %170 = sbr.rel (%p168) target = $region28
        $region27: #{tpu_custom_call.1} parent=23 // pred_region
          %171 = dma.done %s164, 4096
        $region28: #{tpu_custom_call.1} parent=23 // pred_fallthru
          _
        %s172 = sand.u32 %s45, 1
        %s173 = scalar_lea.sflag [#allocation3], %s172
        %s174 = sand.u32 %s45, 1
        %s175 = smul.addr %s174, 256
        %s176 = scalar_lea.vmem [#allocation2], %s175
        %p177 = pneg %p58
        %p178 = pneg %p55
        %p179 = pneg %p86
        %p180 = pneg %p83
        %s181 = sand.u32 %s73, 1
        %s182 = scalar_lea.sflag [#allocation4], %s181
        %s183 = sand.u32 %s73, 1
        %s184 = scalar_lea.vmem [#allocation5], %s183
        %p185 = pneg %p114
        %p186 = pneg %p111
        %s187 = sand.u32 %s101, 1
        %s188 = scalar_lea.sflag [#allocation7], %s187
        %s189 = sand.u32 %s101, 1
        %s190 = scalar_lea.vmem [#allocation6], %s189
        %s191 = smul.u32 32, %s28
        %v192 = vld [vmem:[%s167] sm:$0xff]
        %v193 = vld [vmem:[%s167 + $0x8] sm:$0xff]
        %v194 = vld [vmem:[%s167 + $0x10] sm:$0xff]
        %v195 = vld [vmem:[%s167 + $0x18] sm:$0xff]
        %v196 = vld [vmem:[%s167 + $0x20] sm:$0xff]
        %v197 = vld [vmem:[%s167 + $0x28] sm:$0xff]
        %v198 = vld [vmem:[%s167 + $0x30] sm:$0xff]
        %v199 = vld [vmem:[%s167 + $0x38] sm:$0xff]
        %v200 = vld [vmem:[%s167 + $0x40] sm:$0xff]
        %v201 = vld [vmem:[%s167 + $0x48] sm:$0xff]
        %v202 = vld [vmem:[%s167 + $0x50] sm:$0xff]
        %v203 = vld [vmem:[%s167 + $0x58] sm:$0xff]
        %v204 = vld [vmem:[%s167 + $0x60] sm:$0xff]
        %v205 = vld [vmem:[%s167 + $0x68] sm:$0xff]
        %v206 = vld [vmem:[%s167 + $0x70] sm:$0xff]
        %v207 = vld [vmem:[%s167 + $0x78] sm:$0xff]
        %v208 = vld [vmem:[%s167 + $0x80] sm:$0xff]
        %v209 = vld [vmem:[%s167 + $0x88] sm:$0xff]
        %v210 = vld [vmem:[%s167 + $0x90] sm:$0xff]
        %v211 = vld [vmem:[%s167 + $0x98] sm:$0xff]
        %v212 = vld [vmem:[%s167 + $0xa0] sm:$0xff]
        %v213 = vld [vmem:[%s167 + $0xa8] sm:$0xff]
        %v214 = vld [vmem:[%s167 + $0xb0] sm:$0xff]
        %v215 = vld [vmem:[%s167 + $0xb8] sm:$0xff]
        %v216 = vld [vmem:[%s167 + $0xc0] sm:$0xff]
        %v217 = vld [vmem:[%s167 + $0xc8] sm:$0xff]
        %v218 = vld [vmem:[%s167 + $0xd0] sm:$0xff]
        %v219 = vld [vmem:[%s167 + $0xd8] sm:$0xff]
        %v220 = vld [vmem:[%s167 + $0xe0] sm:$0xff]
        %v221 = vld [vmem:[%s167 + $0xe8] sm:$0xff]
        %v222 = vld [vmem:[%s167 + $0xf0] sm:$0xff]
        %v223 = vld [vmem:[%s167 + $0xf8] sm:$0xff]
        %v224 = vadd.f32 %v192, %v193
        %v225 = vadd.f32 %v224, %v194
        %v226 = vadd.f32 %v225, %v195
        %v227 = vadd.f32 %v226, %v196
        %v228 = vadd.f32 %v227, %v197
        %v229 = vadd.f32 %v228, %v198
        %v230 = vadd.f32 %v229, %v199
        %v231 = vadd.f32 %v230, %v200
        %v232 = vadd.f32 %v231, %v201
        %v233 = vadd.f32 %v232, %v202
        %v234 = vadd.f32 %v233, %v203
        %v235 = vadd.f32 %v234, %v204
        %v236 = vadd.f32 %v235, %v205
        %v237 = vadd.f32 %v236, %v206
        %v238 = vadd.f32 %v237, %v207
        %v239 = vadd.f32 %v238, %v208
        %v240 = vadd.f32 %v239, %v209
        %v241 = vadd.f32 %v240, %v210
        %v242 = vadd.f32 %v241, %v211
        %v243 = vadd.f32 %v242, %v212
        %v244 = vadd.f32 %v243, %v213
        %v245 = vadd.f32 %v244, %v214
        %v246 = vadd.f32 %v245, %v215
        %v247 = vadd.f32 %v246, %v216
        %v248 = vadd.f32 %v247, %v217
        %v249 = vadd.f32 %v248, %v218
        %v250 = vadd.f32 %v249, %v219
        %v251 = vadd.f32 %v250, %v220
        %v252 = vadd.f32 %v251, %v221
        %v253 = vadd.f32 %v252, %v222
        %v254 = vadd.f32 %v253, %v223
        %v255 = vrot.slane %v254, 4
        %v256 = vadd.f32 %v254, %v255
        %v257 = vrot.slane %v256, 2
        %v258 = vadd.f32 %v256, %v257
        %v259 = vrot.slane %v258, 1
        %v260 = vadd.f32 %v258, %v259
        %261 = vst [vmem:[%s184] sm:$0x1] %v260
        %v262 = vmul.f32 %v192, %v192
        %v263 = vmul.f32 %v193, %v193
        %v264 = vmul.f32 %v194, %v194
        %v265 = vmul.f32 %v195, %v195
        %v266 = vmul.f32 %v196, %v196
        %v267 = vmul.f32 %v197, %v197
        %v268 = vmul.f32 %v198, %v198
        %v269 = vmul.f32 %v199, %v199
        %v270 = vmul.f32 %v200, %v200
        %v271 = vmul.f32 %v201, %v201
        %v272 = vmul.f32 %v202, %v202
        %v273 = vmul.f32 %v203, %v203
        %v274 = vmul.f32 %v204, %v204
        %v275 = vmul.f32 %v205, %v205
        %v276 = vmul.f32 %v206, %v206
        %v277 = vmul.f32 %v207, %v207
        %v278 = vmul.f32 %v208, %v208
        %v279 = vmul.f32 %v209, %v209
        %v280 = vmul.f32 %v210, %v210
        %v281 = vmul.f32 %v211, %v211
        %v282 = vmul.f32 %v212, %v212
        %v283 = vmul.f32 %v213, %v213
        %v284 = vmul.f32 %v214, %v214
        %v285 = vmul.f32 %v215, %v215
        %v286 = vmul.f32 %v216, %v216
        %v287 = vmul.f32 %v217, %v217
        %v288 = vmul.f32 %v218, %v218
        %v289 = vmul.f32 %v219, %v219
        %v290 = vmul.f32 %v220, %v220
        %v291 = vmul.f32 %v221, %v221
        %v292 = vmul.f32 %v222, %v222
        %v293 = vmul.f32 %v223, %v223
        %v294 = vadd.f32 %v262, %v263
        %v295 = vadd.f32 %v294, %v264
        %v296 = vadd.f32 %v295, %v265
        %v297 = vadd.f32 %v296, %v266
        %v298 = vadd.f32 %v297, %v267
        %v299 = vadd.f32 %v298, %v268
        %v300 = vadd.f32 %v299, %v269
        %v301 = vadd.f32 %v300, %v270
        %v302 = vadd.f32 %v301, %v271
        %v303 = vadd.f32 %v302, %v272
        %v304 = vadd.f32 %v303, %v273
        %v305 = vadd.f32 %v304, %v274
        %v306 = vadd.f32 %v305, %v275
        %v307 = vadd.f32 %v306, %v276
        %v308 = vadd.f32 %v307, %v277
        %v309 = vadd.f32 %v308, %v278
        %v310 = vadd.f32 %v309, %v279
        %v311 = vadd.f32 %v310, %v280
        %v312 = vadd.f32 %v311, %v281
        %v313 = vadd.f32 %v312, %v282
        %v314 = vadd.f32 %v313, %v283
        %v315 = vadd.f32 %v314, %v284
        %v316 = vadd.f32 %v315, %v285
        %v317 = vadd.f32 %v316, %v286
        %v318 = vadd.f32 %v317, %v287
        %v319 = vadd.f32 %v318, %v288
        %v320 = vadd.f32 %v319, %v289
        %v321 = vadd.f32 %v320, %v290
        %v322 = vadd.f32 %v321, %v291
        %v323 = vadd.f32 %v322, %v292
        %v324 = vadd.f32 %v323, %v293
        %v325 = vrot.slane %v324, 4
        %v326 = vadd.f32 %v324, %v325
        %v327 = vrot.slane %v326, 2
        %v328 = vadd.f32 %v326, %v327
        %v329 = vrot.slane %v328, 1
        %v330 = vadd.f32 %v328, %v329
        %331 = vst [vmem:[%s190] sm:$0x1] %v330
        %s332 = sand.u32 %s73, 1
        %s333 = scalar_lea.sflag [#allocation4], %s332
        %s334 = sand.u32 %s73, 1
        %s335 = scalar_lea.vmem [#allocation5], %s334
        %s336 = sand.u32 %s101, 1
        %s337 = scalar_lea.sflag [#allocation7], %s336
        %s338 = sand.u32 %s101, 1
        %s339 = scalar_lea.vmem [#allocation6], %s338
        // Predicated region
        $region29: #{tpu_custom_call.1} parent=23 // pred_check
          %p340 = pneg %p83
        $region30: #{tpu_custom_call.1} parent=23 // pred_check_branch
          %342 = sbr.rel (%p340) target = $region32
        $region31: #{tpu_custom_call.1} parent=23 // pred_region
          %s344 = ssub.s32 16, 16
          %345 = vsyncadd %s333, %s344
          %s346 = sadd.s32 %s28, %s27
          %s347 = smul.addr %s346, 16
          %s348 = scalar_lea.hbm %s1, %s347
          %s350 = sshll.u32 %s335, 4
          %s351 = int_to_ptr.vmem [resolvable:$true] %s350
          %353 = dma.vmem_to_hbm [thread:$0]  %s351, 16, %s348, %s333
        $region32: #{tpu_custom_call.1} parent=23 // pred_fallthru
          _
        // Predicated region
        $region33: #{tpu_custom_call.1} parent=23 // pred_check
          %p354 = pneg %p111
        $region34: #{tpu_custom_call.1} parent=23 // pred_check_branch
          %356 = sbr.rel (%p354) target = $region36
        $region35: #{tpu_custom_call.1} parent=23 // pred_region
          %s358 = ssub.s32 16, 16
          %359 = vsyncadd %s337, %s358
          %s360 = sadd.s32 %s28, %s27
          %s361 = smul.addr %s360, 16
          %s362 = scalar_lea.hbm %s2, %s361
          %s364 = sshll.u32 %s339, 4
          %s365 = int_to_ptr.vmem [resolvable:$true] %s364
          %367 = dma.vmem_to_hbm [thread:$0]  %s365, 16, %s362, %s337
        $region36: #{tpu_custom_call.1} parent=23 // pred_fallthru
          _
      $region24: #{tpu_custom_call.1} parent=5 // pred_fallthru
        _
      %p368 = scmp.le.s32.totalorder 2, %s18
      // Predicated region
      $region37: #{tpu_custom_call.1} parent=5 // pred_check
        %p369 = pneg %p368
      $region38: #{tpu_custom_call.1} parent=5 // pred_check_branch
        %371 = sbr.rel (%p369) target = $region40
      $region39: #{tpu_custom_call.1} parent=5 // pred_region
        %s372 = ssub.s32 %s18, 2
        // Predicated region
        $region41: #{tpu_custom_call.1} parent=39 // pred_check
          %p373 = pneg %p89
        $region42: #{tpu_custom_call.1} parent=39 // pred_check_branch
          %375 = sbr.rel (%p373) target = $region44
        $region43: #{tpu_custom_call.1} parent=39 // pred_region
          %s376 = sand.u32 %s74, 1
          %s377 = scalar_lea.sflag [#allocation4], %s376
          %s378 = sand.u32 %s74, 1
          %s379 = scalar_lea.vmem [#allocation5], %s378
          %380 = dma.done %s377, 16
        $region44: #{tpu_custom_call.1} parent=39 // pred_fallthru
          _
        // Predicated region
        $region45: #{tpu_custom_call.1} parent=39 // pred_check
          %p381 = pneg %p117
        $region46: #{tpu_custom_call.1} parent=39 // pred_check_branch
          %383 = sbr.rel (%p381) target = $region48
        $region47: #{tpu_custom_call.1} parent=39 // pred_region
          %s384 = sand.u32 %s102, 1
          %s385 = scalar_lea.sflag [#allocation7], %s384
          %s386 = sand.u32 %s102, 1
          %s387 = scalar_lea.vmem [#allocation6], %s386
          %388 = dma.done %s385, 16
        $region48: #{tpu_custom_call.1} parent=39 // pred_fallthru
          _
      $region40: #{tpu_custom_call.1} parent=5 // pred_fallthru
        _
    $region6: #{tpu_custom_call.1} parent=1 // loop_footer
      %s22 = sadd.s32 1, %s18
    $region7: #{tpu_custom_call.1} parent=1 // loop_footer_branch
      %17 = sbr.rel target = $region3
    $region8: #{tpu_custom_call.1} parent=1 // loop_exit
      _
    %389 = vsyncpa [#allocation3], 1
    %s390 = scalar_lea.sflag [#allocation3], 1
    %391 = vsyncpa %s390, 1
    %392 = vsyncpa [#allocation4], 1
    %s393 = scalar_lea.sflag [#allocation4], 1
    %394 = vsyncpa %s393, 1
    %395 = vsyncpa [#allocation7], 1
    %s396 = scalar_lea.sflag [#allocation7], 1
    %397 = vsyncpa %s396, 1

</llo_original>
